<compile_context>
chip_gen: v6e
topology: v6e:2x2x1
jax: 0.10.0
libtpu: 0.0.40
codegen_flags: <defaults>
</compile_context>

<pallas_src>
import jax
import jax.numpy as jnp
from jax import lax
from jax.experimental import pallas as pl
from jax.experimental.pallas import tpu as pltpu

DOF = 2
STDN = 0.3
VARN = STDN ** 2
INV_2VARN = 0.5 / VARN          # fold 0.5 / varn at trace time
# mu0 = 0, var0 = 1  ->  prior = 0.5 * sum_d theta_d^2  (no divide needed)

LANES = 128
SUBLANES = 8
_TR_MAX = 4096                  # rows/step: 4 MiB input + 2 MiB output block
_TARGET_STEPS = 4               # >=2 steps (v7x megacore) and in/out DMA overlap
_MIN_PALLAS_SAMPLES = 1024      # below this, plain jnp beats kernel launch overhead


def _gaussian_kernel(params_ref, th_ref, out_ref):
    # params_ref: (3,) f32 in SMEM = [A0, A1, data]
    # th_ref:     (DOF, TR, 128) f32 tile in VMEM
    # out_ref:    (TR, 128) f32 tile in VMEM
    a0 = params_ref[0]
    a1 = params_ref[1]
    data = params_ref[2]

    t0 = th_ref[0]
    t1 = th_ref[1]

    prior = 0.5 * (t0 * t0 + t1 * t1)            # mu0 = 0, var0 = 1
    shift = a0 * t0 + a1 * t1 - data             # forward model - data
    out_ref[...] = prior + shift * shift * INV_2VARN


def _tile_rows(rows):
    """Pick rows-per-step: >= _TARGET_STEPS grid steps, sublane-aligned, capped."""
    tr = pl.cdiv(rows, _TARGET_STEPS)
    tr = (tr + SUBLANES - 1) // SUBLANES * SUBLANES
    return max(SUBLANES, min(_TR_MAX, tr))


def _pallas_posterior(th3, a_vec, data_scalar):
    """th3: (DOF, rows, 128) f32; returns (rows*128,) f32."""
    rows = th3.shape[1]
    n_main = rows * LANES
    tr = _tile_rows(rows)
    grid = (pl.cdiv(rows, tr),)   # partial last block masked by Pallas

    params = jnp.concatenate(
        [a_vec.reshape(DOF), data_scalar.reshape(1)]).astype(jnp.float32)

    out = pl.pallas_call(
        _gaussian_kernel,
        out_shape=jax.ShapeDtypeStruct((rows, LANES), jnp.float32),
        grid=grid,
        in_specs=[
            pl.BlockSpec(memory_space=pltpu.MemorySpace.SMEM),     # params (3,)
            pl.BlockSpec((DOF, tr, LANES), lambda i: (0, i, 0)),   # thetas tile
        ],
        out_specs=pl.BlockSpec((tr, LANES), lambda i: (i, 0)),
        compiler_params=pltpu.CompilerParams(
            dimension_semantics=("parallel",),
            vmem_limit_bytes=32 * 1024 * 1024,
        ),
        cost_estimate=pl.CostEstimate(
            flops=9 * n_main, bytes_accessed=12 * n_main, transcendentals=0),
    )(params, th3)

    return out.reshape(n_main)


def _jnp_posterior(th, a_vec, data_scalar):
    """Pure-jnp path for tiny batches and the <=127-sample tail."""
    prior = 0.5 * (th[0] * th[0] + th[1] * th[1])
    shift = a_vec[0] * th[0] + a_vec[1] * th[1] - data_scalar
    return prior + shift * shift * INV_2VARN


@jax.jit
def minus_log_posterior(thetas, A, data):
    """thetas: any shape with numel divisible by DoF; A: (DoF, 1); data: scalar."""
    thetas = jnp.asarray(thetas, jnp.float32)
    if thetas.size % DOF != 0:
        raise ValueError(f"thetas.size={thetas.size} not divisible by DoF={DOF}")
    n = thetas.size // DOF
    th = thetas.reshape(DOF, n)
    a_vec = jnp.asarray(A, jnp.float32).reshape(DOF)
    data_scalar = jnp.asarray(data, jnp.float32).reshape(())

    n_main = (n // LANES) * LANES     # 128-aligned prefix handled by the kernel
    if n_main < _MIN_PALLAS_SAMPLES:
        # Tiny batches: kernel launch + wrapper overhead dominate; jnp is faster.
        out = _jnp_posterior(th, a_vec, data_scalar)
    else:
        rows = n_main // LANES
        if n_main == n:
            # Pure bitcast reshape: no extra HBM traffic before the kernel.
            th3 = th.reshape(DOF, rows, LANES)
            out = _pallas_posterior(th3, a_vec, data_scalar)
        else:
            # Kernel on the aligned prefix; <=127-sample tail via jnp; no full pad.
            th3 = lax.slice(th, (0, 0), (DOF, n_main)).reshape(DOF, rows, LANES)
            out_main = _pallas_posterior(th3, a_vec, data_scalar)
            out_tail = _jnp_posterior(th[:, n_main:], a_vec, data_scalar)
            out = jnp.concatenate([out_main, out_tail])

    if n == 1:
        return out[0]                 # match torch .squeeze() -> scalar
    return out


def _reference(thetas, A, data):
    th = jnp.asarray(thetas, jnp.float32).reshape(DOF, -1)
    a = jnp.asarray(A, jnp.float32).reshape(DOF, 1)
    prior = 0.5 * jnp.sum(th ** 2, axis=0)
    F = jnp.sum(a * th, axis=0)
    lik = 0.5 * (F - jnp.asarray(data, jnp.float32)) ** 2 / VARN
    out = prior + lik
    return out[0] if out.shape[0] == 1 else out


if __name__ == "__main__":
    # Deterministic synthetic parameters (stand-ins for torch.manual_seed(40) draws).
    key = jax.random.PRNGKey(0)
    k_a, k_true, k_noise, k_theta, k_odd = jax.random.split(key, 5)

    A = jax.random.normal(k_a, (DOF, 1), dtype=jnp.float32)
    theta_true = jax.random.normal(k_true, (DOF,), dtype=jnp.float32)
    noise = jax.random.normal(k_noise, (1, 1), dtype=jnp.float32) * STDN
    data = jnp.sum(A[:, 0] * theta_true) + noise[0, 0]   # scalar, nData = 1

    # Pallas path, 128-aligned sample count (bitcast reshape, grid of 4 steps).
    n_samples = 4096
    thetas = jax.random.normal(k_theta, (DOF, n_samples), dtype=jnp.float32)
    out = jax.block_until_ready(minus_log_posterior(thetas, A, data))
    ref = _reference(thetas, A, data)
    assert out.shape == (n_samples,)
    assert jnp.allclose(out, ref, atol=1e-4, rtol=1e-5)

    # Non-multiple-of-128 sample count: kernel on prefix + jnp tail.
    n_odd = 1600
    thetas_odd = jax.random.normal(k_odd, (DOF, n_odd), dtype=jnp.float32)
    out_odd = jax.block_until_ready(minus_log_posterior(thetas_odd, A, data))
    ref_odd = _reference(thetas_odd, A, data)
    assert out_odd.shape == (n_odd,)
    assert jnp.allclose(out_odd, ref_odd, atol=1e-4, rtol=1e-5)

    # Small batch (pure-JAX fallback) and single-sample (scalar) paths.
    out_small = jax.block_until_ready(minus_log_posterior(thetas[:, :8], A, data))
    ref_small = _reference(thetas[:, :8], A, data)
    assert out_small.shape == (8,)
    assert jnp.allclose(out_small, ref_small, atol=1e-5, rtol=1e-5)

    out1 = jax.block_until_ready(minus_log_posterior(thetas[:, :1], A, data))
    ref1 = _reference(thetas[:, :1], A, data)
    assert out1.shape == ()
    assert jnp.allclose(out1, ref1, atol=1e-5, rtol=1e-5)

    print("KERNEL_OK")
</pallas_src>

<mosaic_0001>
module attributes {stable_mosaic.version = 11 : i64} {
  func.func @_gaussian_kernel(%arg0: i32, %arg1: memref<3xf32, #tpu.memory_space<smem>>, %arg2: memref<2x8x128xf32, #tpu.memory_space<vmem>>, %arg3: memref<8x128xf32, #tpu.memory_space<vmem>>) attributes {dimension_semantics = [#tpu.dimension_semantics<parallel>], iteration_bounds = array<i64: 4>, scalar_prefetch = 0 : i64, scratch_operands = 0 : i64, tpu.core_type = #tpu.core_type<tc>, window_params = [{transform_indices = @transform_0, window_bounds = array<i64: 3>}, {transform_indices = @transform_1, window_bounds = array<i64: 2, 8, 128>}, {transform_indices = @transform_2, window_bounds = array<i64: 8, 128>}]} {
    %c0 = arith.constant 0 : index
    %0 = memref.load %arg1[%c0] : memref<3xf32, #tpu.memory_space<smem>>
    %c1 = arith.constant 1 : index
    %1 = memref.load %arg1[%c1] : memref<3xf32, #tpu.memory_space<smem>>
    %c2 = arith.constant 2 : index
    %2 = memref.load %arg1[%c2] : memref<3xf32, #tpu.memory_space<smem>>
    %c0_0 = arith.constant 0 : index
    %c0_1 = arith.constant 0 : index
    %c0_2 = arith.constant 0 : index
    %3 = vector.load %arg2[%c0_0, %c0_1, %c0_2] : memref<2x8x128xf32, #tpu.memory_space<vmem>>, vector<1x8x128xf32>
    %4 = vector.shape_cast %3 : vector<1x8x128xf32> to vector<8x128xf32>
    %c1_3 = arith.constant 1 : index
    %c0_4 = arith.constant 0 : index
    %c0_5 = arith.constant 0 : index
    %5 = vector.load %arg2[%c1_3, %c0_4, %c0_5] : memref<2x8x128xf32, #tpu.memory_space<vmem>>, vector<1x8x128xf32>
    %6 = vector.shape_cast %5 : vector<1x8x128xf32> to vector<8x128xf32>
    %7 = arith.mulf %4, %4 : vector<8x128xf32>
    %8 = arith.mulf %6, %6 : vector<8x128xf32>
    %9 = arith.addf %7, %8 : vector<8x128xf32>
    %cst = arith.constant 5.000000e-01 : f32
    %10 = vector.broadcast %cst : f32 to vector<8x128xf32>
    %11 = arith.mulf %10, %9 : vector<8x128xf32>
    %12 = vector.broadcast %0 : f32 to vector<8x128xf32>
    %13 = arith.mulf %12, %4 : vector<8x128xf32>
    %14 = vector.broadcast %1 : f32 to vector<8x128xf32>
    %15 = arith.mulf %14, %6 : vector<8x128xf32>
    %16 = arith.addf %13, %15 : vector<8x128xf32>
    %17 = vector.broadcast %2 : f32 to vector<8x128xf32>
    %18 = arith.subf %16, %17 : vector<8x128xf32>
    %19 = arith.mulf %18, %18 : vector<8x128xf32>
    %cst_6 = arith.constant 5.55555534 : f32
    %20 = vector.broadcast %cst_6 : f32 to vector<8x128xf32>
    %21 = arith.mulf %19, %20 : vector<8x128xf32>
    %22 = arith.addf %11, %21 : vector<8x128xf32>
    %c0_7 = arith.constant 0 : index
    %c0_8 = arith.constant 0 : index
    %23 = vector.load %arg3[%c0_7, %c0_8] : memref<8x128xf32, #tpu.memory_space<vmem>>, vector<8x128xf32>
    tpu.vector_store %arg3[%c0_7, %c0_8], %22 {strides = array<i32>} : memref<8x128xf32, #tpu.memory_space<vmem>>, vector<8x128xf32>,
    return
  }
  func.func @transform_0(%arg0: i32) -> i32 {
    %c0_i32 = arith.constant 0 : i32
    %c0_i32_0 = arith.constant 0 : i32
    return %c0_i32 : i32
  }
  func.func @transform_1(%arg0: i32) -> (i32, i32, i32) {
    %c0_i32 = arith.constant 0 : i32
    %c0_i32_0 = arith.constant 0 : i32
    %c0_i32_1 = arith.constant 0 : i32
    return %c0_i32, %arg0, %c0_i32_0 : i32, i32, i32
  }
  func.func @transform_2(%arg0: i32) -> (i32, i32) {
    %c0_i32 = arith.constant 0 : i32
    %c0_i32_0 = arith.constant 0 : i32
    return %arg0, %c0_i32 : i32, i32
  }
}

</mosaic_0001>

<llo_original>
// kernel: minus_log_posterior.1
$region0: #{minus_log_posterior.1}
  #allocation0 [shape = 'u32[]', space=smem, size = 0x4, offset = 0x4, fixed_abs, tag = 'smem constant byte address 0x4 - core index']
  #allocation1 [shape = 'u32[144,128]{1,0:T(1,128)}', space=vmem, size = 0x12000, scoped, tag = 'internal scratch']
  %s0 = inlined_call_operand.vmem [shape: f32[3], index: 0, kind: input, shape index: {}]
  %s1 = inlined_call_operand.vmem [shape: f32[2,32,128], index: 1, kind: input, shape index: {}]
  %s2 = inlined_call_operand.hbm [shape: f32[32,128], index: 2, kind: output, shape index: {}]
  %s3 = sld [smem:[#allocation0]]
  $region83: #{minus_log_posterior.1} parent=0
    _
  %s5 = ssub.s32 1, %s3
  %s6 = scalar_select 0, %s5, %s3
  $region1: #{minus_log_posterior.1} parent=0
    #allocation2 [shape = 'u8[512]{0}', space=smem, size = 0x200, scoped, tag = 'input window, operand 0, single buffered']
    #allocation3 [shape = 's32[2]{0}', space=sflag, size = 0x8, scoped, tag = 'scoped memory for minus_log_posterior.1']
    #allocation4 [shape = 's32[2]{0}', space=sflag, size = 0x8, scoped, tag = 'scoped memory for minus_log_posterior.1']
    #allocation5 [shape = 'u8[16384]{0}', space=vmem, size = 0x4000, scoped, tag = 'input window, operand 1']
    #allocation6 [shape = 'u8[8192]{0}', space=vmem, size = 0x2000, scoped, tag = 'output window, operand 0']
    %7 = vsyncpa [#allocation4], 0
    %8 = vsyncpa [#allocation3], 0
    %s9 = scalar_lea.sflag [#allocation3], 1
    %10 = vsyncpa %s9, 0
    loop: start=0, step=1, limit=6
    $region2: #{minus_log_posterior.1} parent=1 // loop_pre_header
      _
    $region3: #{minus_log_posterior.1} parent=1 // loop_header
      %s12 = sphi 0, %s16
      %p13 = scmp.ge.s32.totalorder %s12, 6
      %s20 = sphi 0, %s20
      %s22 = sphi 0, %s20
      %s23 = sphi 0, %s22
      %s37 = sphi 0, %s23
      %s43 = sphi 0, %s45
      %s46 = sphi 0, %s43
      %s47 = sphi 0, %s46
      %s63 = sphi 0, %s47
      %s69 = sphi 0, %s71
      %s72 = sphi 0, %s69
      %s73 = sphi 0, %s72
      %s89 = sphi 0, %s73
    $region4: #{minus_log_posterior.1} parent=1 // loop_header_branch
      %15 = sbr.rel (%p13) target = $region8
    $region5: #{minus_log_posterior.1} parent=1 // loop_body
      %s17 = ssub.s32 %s12, 1
      %s18 = ssub.s32 %s12, 2
      %s19 = sadd.s32 %s12, 1
      %s21 = sadd.s32 %s20, 1
      %p24 = scmp.eq.s32.totalorder %s12, 3
      %p25 = scmp.ne.s32.totalorder %s20, %s22
      %p26 = scmp.eq.s32.totalorder %s12, 0
      %p27 = por %p25, %p26
      %p28 = scmp.ne.s32.totalorder %s20, %s22
      %p29 = scmp.eq.s32.totalorder %s17, 3
      %p30 = por %p28, %p29
      %p31 = scmp.ne.s32.totalorder %s22, %s23
      %p32 = scmp.eq.s32.totalorder %s17, 0
      %p33 = por %p31, %p32
      %p34 = scmp.ne.s32.totalorder %s22, %s23
      %p35 = scmp.eq.s32.totalorder %s18, 3
      %p36 = por %p34, %p35
      %p38 = scmp.ne.s32.totalorder %s23, %s37
      %p39 = scmp.eq.s32.totalorder %s18, 0
      %p40 = por %p38, %p39
      %s41 = ssub.s32 %s12, %s19
      %p42 = scmp.eq.s32.totalorder %s41, 0
      %s44 = sadd.s32 %s43, 1
      %s45 = scalar_select %p42, %s43, %s44
      %p48 = pneg %p42
      %p49 = scmp.eq.s32.totalorder %s12, 3
      %p50 = por %p48, %p49
      %p51 = scmp.ne.s32.totalorder %s43, %s46
      %p52 = scmp.eq.s32.totalorder %s12, 0
      %p53 = por %p51, %p52
      %p54 = scmp.ne.s32.totalorder %s43, %s46
      %p55 = scmp.eq.s32.totalorder %s17, 3
      %p56 = por %p54, %p55
      %p57 = scmp.ne.s32.totalorder %s46, %s47
      %p58 = scmp.eq.s32.totalorder %s17, 0
      %p59 = por %p57, %p58
      %p60 = scmp.ne.s32.totalorder %s46, %s47
      %p61 = scmp.eq.s32.totalorder %s18, 3
      %p62 = por %p60, %p61
      %p64 = scmp.ne.s32.totalorder %s47, %s63
      %p65 = scmp.eq.s32.totalorder %s18, 0
      %p66 = por %p64, %p65
      %s67 = ssub.s32 %s12, %s19
      %p68 = scmp.eq.s32.totalorder %s67, 0
      %s70 = sadd.s32 %s69, 1
      %s71 = scalar_select %p68, %s69, %s70
      %p74 = pneg %p68
      %p75 = scmp.eq.s32.totalorder %s12, 3
      %p76 = por %p74, %p75
      %p77 = scmp.ne.s32.totalorder %s69, %s72
      %p78 = scmp.eq.s32.totalorder %s12, 0
      %p79 = por %p77, %p78
      %p80 = scmp.ne.s32.totalorder %s69, %s72
      %p81 = scmp.eq.s32.totalorder %s17, 3
      %p82 = por %p80, %p81
      %p83 = scmp.ne.s32.totalorder %s72, %s73
      %p84 = scmp.eq.s32.totalorder %s17, 0
      %p85 = por %p83, %p84
      %p86 = scmp.ne.s32.totalorder %s72, %s73
      %p87 = scmp.eq.s32.totalorder %s18, 3
      %p88 = por %p86, %p87
      %p90 = scmp.ne.s32.totalorder %s73, %s89
      %p91 = scmp.eq.s32.totalorder %s18, 0
      %p92 = por %p90, %p91
      %p93 = scmp.le.s32.totalorder 1, %s12
      %p94 = scmp.lt.s32.totalorder %s12, 5
      %p95 = pnand %p93, %p94
      %p96 = pneg %p95
      // Predicated region
      $region9: #{minus_log_posterior.1} parent=5 // pred_check
        _
      $region10: #{minus_log_posterior.1} parent=5 // pred_check_branch
        %98 = sbr.rel (%p95) target = $region12
      $region11: #{minus_log_posterior.1} parent=5 // pred_region
        %s99 = ssub.s32 %s12, 1
        // Predicated region
        $region13: #{minus_log_posterior.1} parent=11 // pred_check
          %p100 = pneg %p33
        $region14: #{minus_log_posterior.1} parent=11 // pred_check_branch
          %102 = sbr.rel (%p100) target = $region16
        $region15: #{minus_log_posterior.1} parent=11 // pred_region
          %s104 = ssub.s32 16, 16
          %105 = vsyncadd [#allocation4], %s104
          %s107 = sshll.u32 %s0, 4
          %s108 = int_to_ptr.vmem [resolvable:$true] %s107
          %110 = dma.vmem_to_smem %s108, 16, [#allocation2], [#allocation4]
        $region16: #{minus_log_posterior.1} parent=11 // pred_fallthru
          _
      $region12: #{minus_log_posterior.1} parent=5 // pred_fallthru
        _
      %p111 = scmp.lt.s32.totalorder %s12, 4
      // Predicated region
      $region17: #{minus_log_posterior.1} parent=5 // pred_check
        %p112 = pneg %p111
      $region18: #{minus_log_posterior.1} parent=5 // pred_check_branch
        %114 = sbr.rel (%p112) target = $region20
      $region19: #{minus_log_posterior.1} parent=5 // pred_region
        // Predicated region
        $region21: #{minus_log_posterior.1} parent=19 // pred_check
          %p115 = pneg %p53
        $region22: #{minus_log_posterior.1} parent=19 // pred_check_branch
          %117 = sbr.rel (%p115) target = $region24
        $region23: #{minus_log_posterior.1} parent=19 // pred_region
          %s118 = sand.u32 %s43, 1
          %s119 = sand.u32 %s43, 1
          %s120 = smul.addr %s119, 16
          %s121 = scalar_lea.vmem [#allocation5], %s120
          %s122 = smul.addr %s12, 8
          %s123 = scalar_lea.vmem %s1, %s122
          // Predicated region
          $region25: #{minus_log_posterior.1} parent=23 // pred_check
            _
          $region26: #{minus_log_posterior.1} parent=23 // pred_check_branch
            %125 = sbr.rel (0) target = $region28
          $region27: #{minus_log_posterior.1} parent=23 // pred_region
            // Predicated region
            $region29: #{minus_log_posterior.1} parent=27 // pred_check
              _
            $region30: #{minus_log_posterior.1} parent=27 // pred_check_branch
              %127 = sbr.rel (0) target = $region32
            $region31: #{minus_log_posterior.1} parent=27 // pred_region
              // Predicated region
              $region44: #{minus_log_posterior.1} parent=31 // pred_check
                _
              $region45: #{minus_log_posterior.1} parent=31 // pred_check_branch
                %145 = sbr.rel (0) target = $region47
              $region46: #{minus_log_posterior.1} parent=31 // pred_region
                loop: start=0, step=1, limit=1
                $region48: #{minus_log_posterior.1} parent=46 // loop_pre_header
                  _
                $region49: #{minus_log_posterior.1} parent=46 // loop_header
                  %s147 = sphi 0, %s151
                  %p148 = scmp.ge.s32.totalorder %s147, 1
                  %s152 = sphi %s123, %s123
                  %s153 = sphi %s121, %s121
                $region50: #{minus_log_posterior.1} parent=46 // loop_header_branch
                  %150 = sbr.rel (%p148) target = $region54
                $region51: #{minus_log_posterior.1} parent=46 // loop_body
                  %v154 = vld [vmem:[%s152] sm:$0xff]
                  %155 = vst [vmem:[%s153] sm:$0xff] %v154
                  %v156 = vld [vmem:[%s152 + $0x20] sm:$0xff]
                  %157 = vst [vmem:[%s153 + $0x8] sm:$0xff] %v156
                $region52: #{minus_log_posterior.1} parent=46 // loop_footer
                  %s151 = sadd.s32 1, %s147
                $region53: #{minus_log_posterior.1} parent=46 // loop_footer_branch
                  %146 = sbr.rel target = $region49
                $region54: #{minus_log_posterior.1} parent=46 // loop_exit
                  _
              $region47: #{minus_log_posterior.1} parent=31 // pred_fallthru
                _
              // Predicated region
              $region55: #{minus_log_posterior.1} parent=31 // pred_check
                _
              $region56: #{minus_log_posterior.1} parent=31 // pred_check_branch
                %159 = sbr.rel target = $region58
              $region57: #{minus_log_posterior.1} parent=31 // pred_region
                _
              $region58: #{minus_log_posterior.1} parent=31 // pred_fallthru
                _
            $region32: #{minus_log_posterior.1} parent=27 // pred_fallthru
              _
            // Predicated region
            $region33: #{minus_log_posterior.1} parent=27 // pred_check
              _
            $region34: #{minus_log_posterior.1} parent=27 // pred_check_branch
              %129 = sbr.rel target = $region36
            $region35: #{minus_log_posterior.1} parent=27 // pred_region
              %s131 = ssub.s32 256, 1
              loop: start=0, step=1, limit=1
              $region37: #{minus_log_posterior.1} parent=35 // loop_pre_header
                _
              $region38: #{minus_log_posterior.1} parent=35 // loop_header
                %s133 = sphi 0, %s137
                %p134 = scmp.ge.s32.totalorder %s133, 1
                %s138 = sphi %s123, %s123
                %s139 = sphi %s121, %s121
              $region39: #{minus_log_posterior.1} parent=35 // loop_header_branch
                %136 = sbr.rel (%p134) target = $region43
              $region40: #{minus_log_posterior.1} parent=35 // loop_body
                %v140 = vld [vmem:[%s138] sm:%s131]
                %141 = vst [vmem:[%s139] sm:%s131] %v140
                %v142 = vld [vmem:[%s138 + $0x20] sm:%s131]
                %143 = vst [vmem:[%s139 + $0x8] sm:%s131] %v142
              $region41: #{minus_log_posterior.1} parent=35 // loop_footer
                %s137 = sadd.s32 1, %s133
              $region42: #{minus_log_posterior.1} parent=35 // loop_footer_branch
                %132 = sbr.rel target = $region38
              $region43: #{minus_log_posterior.1} parent=35 // loop_exit
                _
            $region36: #{minus_log_posterior.1} parent=27 // pred_fallthru
              _
          $region28: #{minus_log_posterior.1} parent=23 // pred_fallthru
            _
          %160 = vnop
        $region24: #{minus_log_posterior.1} parent=19 // pred_fallthru
          _
      $region20: #{minus_log_posterior.1} parent=5 // pred_fallthru
        _
      %p161 = scmp.le.s32.totalorder 1, %s12
      %p162 = scmp.lt.s32.totalorder %s12, 5
      %p163 = pnand %p161, %p162
      %p164 = pneg %p163
      // Predicated region
      $region59: #{minus_log_posterior.1} parent=5 // pred_check
        _
      $region60: #{minus_log_posterior.1} parent=5 // pred_check_branch
        %166 = sbr.rel (%p163) target = $region62
      $region61: #{minus_log_posterior.1} parent=5 // pred_region
        %s167 = ssub.s32 %s12, 1
        // Predicated region
        $region63: #{minus_log_posterior.1} parent=61 // pred_check
          %p168 = pneg %p33
        $region64: #{minus_log_posterior.1} parent=61 // pred_check_branch
          %170 = sbr.rel (%p168) target = $region66
        $region65: #{minus_log_posterior.1} parent=61 // pred_region
          %171 = dma.done [#allocation4], 16
        $region66: #{minus_log_posterior.1} parent=61 // pred_fallthru
          _
        %s172 = sand.u32 %s46, 1
        %s173 = sand.u32 %s46, 1
        %s174 = smul.addr %s173, 16
        %s175 = scalar_lea.vmem [#allocation5], %s174
        // Predicated region
        $region67: #{minus_log_posterior.1} parent=61 // pred_check
          %p176 = pneg %p59
        $region68: #{minus_log_posterior.1} parent=61 // pred_check_branch
          %178 = sbr.rel (%p176) target = $region70
        $region69: #{minus_log_posterior.1} parent=61 // pred_region
          _
        $region70: #{minus_log_posterior.1} parent=61 // pred_fallthru
          _
        %179 = sfence
        %p180 = pneg %p33
        %p181 = pneg %p30
        %s182 = sand.u32 %s46, 1
        %s183 = sand.u32 %s46, 1
        %s184 = smul.addr %s183, 16
        %s185 = scalar_lea.vmem [#allocation5], %s184
        %p186 = pneg %p59
        %p187 = pneg %p56
        %p188 = pneg %p85
        %p189 = pneg %p82
        %s190 = sand.u32 %s72, 1
        %s191 = scalar_lea.sflag [#allocation3], %s190
        %s192 = sand.u32 %s72, 1
        %s193 = smul.addr %s192, 8
        %s194 = scalar_lea.vmem [#allocation6], %s193
        %s195 = sld [smem:[#allocation2]]
        %s196 = sld [smem:[#allocation2 + $0x1]]
        %s197 = sld [smem:[#allocation2 + $0x2]]
        %v198 = vld [vmem:[%s175] sm:$0xff]
        %s199 = scalar_lea.vmem %s175, 8 [#allocation5]
        %v200 = vld [vmem:[%s199] sm:$0xff]
        %v201 = vmul.f32 %v198, %v198
        %v202 = vmul.f32 %v200, %v200
        %v203 = vadd.f32 %v201, %v202
        %v204 = vmul.f32 %v203, 0.5
        %v205 = vstv %s195
        %v206 = vmul.f32 %v205, %v198
        %v207 = vstv %s196
        %v208 = vmul.f32 %v207, %v200
        %v209 = vadd.f32 %v206, %v208
        %v210 = vstv %s197
        %v211 = vsub.f32 %v209, %v210
        %v212 = vmul.f32 %v211, %v211
        %v213 = vmul.f32 %v212, 5.5555553
        %v214 = vadd.f32 %v204, %v213
        %215 = vst [vmem:[%s194] sm:$0xff] %v214
        %s216 = sand.u32 %s72, 1
        %s217 = scalar_lea.sflag [#allocation3], %s216
        %s218 = sand.u32 %s72, 1
        %s219 = smul.addr %s218, 8
        %s220 = scalar_lea.vmem [#allocation6], %s219
        // Predicated region
        $region71: #{minus_log_posterior.1} parent=61 // pred_check
          %p221 = pneg %p82
        $region72: #{minus_log_posterior.1} parent=61 // pred_check_branch
          %223 = sbr.rel (%p221) target = $region74
        $region73: #{minus_log_posterior.1} parent=61 // pred_region
          %s225 = ssub.s32 128, 128
          %226 = vsyncadd %s217, %s225
          %s227 = smul.addr %s17, 128
          %s228 = scalar_lea.hbm %s2, %s227
          %s230 = sshll.u32 %s220, 4
          %s231 = int_to_ptr.vmem [resolvable:$true] %s230
          %233 = dma.vmem_to_hbm [thread:$0]  %s231, 128, %s228, %s217
        $region74: #{minus_log_posterior.1} parent=61 // pred_fallthru
          _
      $region62: #{minus_log_posterior.1} parent=5 // pred_fallthru
        _
      %p234 = scmp.le.s32.totalorder 2, %s12
      // Predicated region
      $region75: #{minus_log_posterior.1} parent=5 // pred_check
        %p235 = pneg %p234
      $region76: #{minus_log_posterior.1} parent=5 // pred_check_branch
        %237 = sbr.rel (%p235) target = $region78
      $region77: #{minus_log_posterior.1} parent=5 // pred_region
        %s238 = ssub.s32 %s12, 2
        // Predicated region
        $region79: #{minus_log_posterior.1} parent=77 // pred_check
          %p239 = pneg %p88
        $region80: #{minus_log_posterior.1} parent=77 // pred_check_branch
          %241 = sbr.rel (%p239) target = $region82
        $region81: #{minus_log_posterior.1} parent=77 // pred_region
          %s242 = sand.u32 %s73, 1
          %s243 = scalar_lea.sflag [#allocation3], %s242
          %s244 = sand.u32 %s73, 1
          %s245 = smul.addr %s244, 8
          %s246 = scalar_lea.vmem [#allocation6], %s245
          %247 = dma.done %s243, 128
        $region82: #{minus_log_posterior.1} parent=77 // pred_fallthru
          _
      $region78: #{minus_log_posterior.1} parent=5 // pred_fallthru
        _
    $region6: #{minus_log_posterior.1} parent=1 // loop_footer
      %s16 = sadd.s32 1, %s12
    $region7: #{minus_log_posterior.1} parent=1 // loop_footer_branch
      %11 = sbr.rel target = $region3
    $region8: #{minus_log_posterior.1} parent=1 // loop_exit
      _
    %248 = vsyncpa [#allocation3], 1
    %s249 = scalar_lea.sflag [#allocation3], 1
    %250 = vsyncpa %s249, 1
    %251 = vsyncpa [#allocation4], 1
    %s252 = scalar_lea.sflag [#allocation4], 1
    %253 = vsyncpa %s252, 1

</llo_original>
